<compile_context>
chip_gen: v5e
topology: v5e:2x2
jax: 0.10.0
libtpu: 0.0.40
codegen_flags: <defaults>
</compile_context>

<pallas_src>
import functools

import numpy as np
import jax
import jax.numpy as jnp
from jax.experimental import pallas as pl
from jax.experimental.pallas import tpu as pltpu


# --------------------------------------------------------------------------
# 2-D DFT basis (host-side, static-shape constant)
# --------------------------------------------------------------------------

def _dft2_basis(h, w):
    """Re/Im of the symmetric (H*W, H*W) 2-D DFT matrix B = F_H (x) F_W,
    B[(k,l),(m,n)] = exp(-2i*pi*(k*m/H + l*n/W)).  Signs are folded in, so the
    in-kernel transform is simply  z = x @ BR + i * (x @ BI)."""
    ih = np.arange(h)
    iw = np.arange(w)
    ang_h = 2.0 * np.pi * ((np.outer(ih, ih) % h).astype(np.float64)) / h   # (H,H)
    ang_w = 2.0 * np.pi * ((np.outer(iw, iw) % w).astype(np.float64)) / w   # (W,W)
    ang = (ang_h[:, None, :, None] + ang_w[None, :, None, :]).reshape(h * w, h * w)
    return np.cos(ang), -np.sin(ang)


# --------------------------------------------------------------------------
# Pallas kernel: per grid step, G flattened images of gen + target -> partial sum
# --------------------------------------------------------------------------

def _freq_l1_kernel(gen_ref, tgt_ref, br_ref, bi_ref, out_ref, *,
                    n_imgs, block_rows, ragged):
    br = br_ref[...]                                   # (HW, HW) bf16  Re(F_H (x) F_W)
    bi = bi_ref[...]                                   # (HW, HW) bf16  Im(F_H (x) F_W)

    def fft2_mag(x_ref):
        # bf16 MXU operands, f32 accumulation (single-pass MXU on all chips).
        x = x_ref[...].astype(jnp.bfloat16)            # (G, HW) flattened images
        zr = jnp.dot(x, br, preferred_element_type=jnp.float32)
        zi = jnp.dot(x, bi, preferred_element_type=jnp.float32)
        return jnp.sqrt(zr * zr + zi * zi)             # (G, HW) |FFT2| per image row

    diff = jnp.abs(fft2_mag(gen_ref) - fft2_mag(tgt_ref))

    if ragged:                                         # static Python flag (closure)
        # Mask rows past the true image count in the (partial) last block.  Row m of
        # the matmul output depends only on input row m, so garbage rows cannot
        # pollute valid ones and are simply dropped here.
        valid = n_imgs - pl.program_id(0) * block_rows
        rows = jax.lax.broadcasted_iota(jnp.int32, diff.shape, 0)
        diff = jnp.where(rows < valid, diff, 0.0)

    # One lane-aligned (1, 8, 128) tile per grid step; wrapper reads element [0, 0].
    out_ref[...] = jnp.broadcast_to(jnp.sum(diff), out_ref.shape)


# --------------------------------------------------------------------------
# Wrapper
# --------------------------------------------------------------------------

def frequency_loss(generated_img, target_img, *, target_block_bytes=1 << 20):
    """Pallas equivalent of FrequencyLoss.forward (L1 of 2-D FFT magnitudes)."""
    assert generated_img.shape == target_img.shape
    shape = generated_img.shape
    H, W = shape[-2], shape[-1]
    HW = H * W
    n_imgs = int(np.prod(shape[:-2])) if len(shape) > 2 else 1

    # Dense (HW x HW) basis must fit comfortably in VMEM.
    # TODO(synk): for large images (H*W > 1024) switch to two separable DFT passes
    # ((H,H)/(W,W) bases with a wrapper-side transpose) instead of the dense basis.
    assert HW <= 1024, f"dense 2-D DFT basis too large for VMEM (H*W={HW})"

    # Flatten each image to one lane-dense row (contiguous reshape: no data movement,
    # no dtype up-cast, no zero-padding concatenate).
    gen2 = generated_img.reshape(n_imgs, HW)
    tgt2 = target_img.reshape(n_imgs, HW)

    # Rows per grid step: ~target_block_bytes of image data per input per step,
    # sublane-aligned (multiple of 8), capped so nblk >= 2 when there is enough work
    # (keeps both v7x TensorCores busy).  Ragged last block is masked in the kernel.
    itemsize = np.dtype(generated_img.dtype).itemsize
    if n_imgs <= 8:
        G = n_imgs                          # single block (block dim == full array dim)
    else:
        G = min(max(target_block_bytes // (HW * itemsize), 8), -(-n_imgs // 2))
        G = max(8, (G // 8) * 8)
    nblk = -(-n_imgs // G)                  # cdiv
    ragged = (n_imgs % G) != 0

    br_np, bi_np = _dft2_basis(H, W)
    br = jnp.asarray(br_np, jnp.bfloat16)
    bi = jnp.asarray(bi_np, jnp.bfloat16)

    kernel = functools.partial(_freq_l1_kernel,
                               n_imgs=n_imgs, block_rows=G, ragged=ragged)

    partial = pl.pallas_call(
        kernel,
        out_shape=jax.ShapeDtypeStruct((nblk, 8, 128), jnp.float32),
        grid=(nblk,),
        in_specs=[
            pl.BlockSpec((G, HW), lambda i: (i, 0)),       # gen images (streamed)
            pl.BlockSpec((G, HW), lambda i: (i, 0)),       # tgt images (streamed)
            pl.BlockSpec((HW, HW), lambda i: (0, 0)),      # Re basis (fetched once)
            pl.BlockSpec((HW, HW), lambda i: (0, 0)),      # Im basis (fetched once)
        ],
        out_specs=pl.BlockSpec((1, 8, 128), lambda i: (i, 0, 0)),
        compiler_params=pltpu.CompilerParams(
            dimension_semantics=("parallel",),
            vmem_limit_bytes=48 * 1024 * 1024),
    )(gen2, tgt2, br, bi)

    total = jnp.sum(partial[:, 0, 0])
    count = n_imgs * H * W                  # true element count (nn.L1Loss mean)
    return total / jnp.float32(count)


# --------------------------------------------------------------------------
# Main
# --------------------------------------------------------------------------

if __name__ == "__main__":
    B, C, H, W = 2, 4, 16, 16
    key = jax.random.PRNGKey(0)
    k1, k2 = jax.random.split(key)
    gen = jax.random.normal(k1, (B, C, H, W), jnp.float32)
    tgt = jax.random.normal(k2, (B, C, H, W), jnp.float32)

    loss_fn = jax.jit(frequency_loss)
    loss = jax.block_until_ready(loss_fn(gen, tgt))

    # host-side numpy reference (validates the DFT-by-matmul implementation)
    g_np = np.asarray(gen, np.float64)
    t_np = np.asarray(tgt, np.float64)
    ref = np.mean(np.abs(np.abs(np.fft.fftn(g_np, axes=(-2, -1)))
                         - np.abs(np.fft.fftn(t_np, axes=(-2, -1)))))

    assert np.isfinite(float(loss)), float(loss)
    # bf16 MXU operands with f32 accumulation: loss-level error is ~1e-3 relative;
    # 1e-2 relative tolerance keeps a comfortable margin.
    assert abs(float(loss) - ref) <= 1e-2 * max(1.0, abs(ref)), (float(loss), ref)
    print("KERNEL_OK")
</pallas_src>

<mosaic_0001>
module attributes {stable_mosaic.version = 11 : i64} {
  func.func @_freq_l1_kernel(%arg0: i32, %arg1: memref<8x256xf32, #tpu.memory_space<vmem>>, %arg2: memref<8x256xf32, #tpu.memory_space<vmem>>, %arg3: memref<256x256xbf16, #tpu.memory_space<vmem>>, %arg4: memref<256x256xbf16, #tpu.memory_space<vmem>>, %arg5: memref<1x8x128xf32, #tpu.memory_space<vmem>>) attributes {dimension_semantics = [#tpu.dimension_semantics<parallel>], iteration_bounds = array<i64: 1>, scalar_prefetch = 0 : i64, scratch_operands = 0 : i64, tpu.core_type = #tpu.core_type<tc>, window_params = [{transform_indices = @transform_0, window_bounds = array<i64: 8, 256>}, {transform_indices = @transform_1, window_bounds = array<i64: 8, 256>}, {pipeline_mode = #tpu.pipeline_mode<synchronous>, transform_indices = @transform_2, window_bounds = array<i64: 256, 256>}, {pipeline_mode = #tpu.pipeline_mode<synchronous>, transform_indices = @transform_3, window_bounds = array<i64: 256, 256>}, {transform_indices = @transform_4, window_bounds = array<i64: 1, 8, 128>}]} {
    %c0 = arith.constant 0 : index
    %c0_0 = arith.constant 0 : index
    %0 = vector.load %arg3[%c0, %c0_0] : memref<256x256xbf16, #tpu.memory_space<vmem>>, vector<256x256xbf16>
    %c0_1 = arith.constant 0 : index
    %c0_2 = arith.constant 0 : index
    %1 = vector.load %arg4[%c0_1, %c0_2] : memref<256x256xbf16, #tpu.memory_space<vmem>>, vector<256x256xbf16>
    %c0_3 = arith.constant 0 : index
    %c0_4 = arith.constant 0 : index
    %2 = vector.load %arg1[%c0_3, %c0_4] : memref<8x256xf32, #tpu.memory_space<vmem>>, vector<8x256xf32>
    %3 = arith.truncf %2 : vector<8x256xf32> to vector<8x256xbf16>
    %cst = arith.constant dense<0.000000e+00> : vector<8x256xf32>
    %4 = tpu.matmul %3, %0, %cst {dimension_numbers = #tpu.dot_dimension_numbers<[1], [0], [0], [1], [0, 0, 1, 1], [], []>} : vector<8x256xbf16>, vector<256x256xbf16>, vector<8x256xf32> -> vector<8x256xf32>
    %cst_5 = arith.constant dense<0.000000e+00> : vector<8x256xf32>
    %5 = tpu.matmul %3, %1, %cst_5 {dimension_numbers = #tpu.dot_dimension_numbers<[1], [0], [0], [1], [0, 0, 1, 1], [], []>} : vector<8x256xbf16>, vector<256x256xbf16>, vector<8x256xf32> -> vector<8x256xf32>
    %6 = arith.mulf %4, %4 : vector<8x256xf32>
    %7 = arith.mulf %5, %5 : vector<8x256xf32>
    %8 = arith.addf %6, %7 : vector<8x256xf32>
    %9 = math.sqrt %8 : vector<8x256xf32>
    %c0_6 = arith.constant 0 : index
    %c0_7 = arith.constant 0 : index
    %10 = vector.load %arg2[%c0_6, %c0_7] : memref<8x256xf32, #tpu.memory_space<vmem>>, vector<8x256xf32>
    %11 = arith.truncf %10 : vector<8x256xf32> to vector<8x256xbf16>
    %cst_8 = arith.constant dense<0.000000e+00> : vector<8x256xf32>
    %12 = tpu.matmul %11, %0, %cst_8 {dimension_numbers = #tpu.dot_dimension_numbers<[1], [0], [0], [1], [0, 0, 1, 1], [], []>} : vector<8x256xbf16>, vector<256x256xbf16>, vector<8x256xf32> -> vector<8x256xf32>
    %cst_9 = arith.constant dense<0.000000e+00> : vector<8x256xf32>
    %13 = tpu.matmul %11, %1, %cst_9 {dimension_numbers = #tpu.dot_dimension_numbers<[1], [0], [0], [1], [0, 0, 1, 1], [], []>} : vector<8x256xbf16>, vector<256x256xbf16>, vector<8x256xf32> -> vector<8x256xf32>
    %14 = arith.mulf %12, %12 : vector<8x256xf32>
    %15 = arith.mulf %13, %13 : vector<8x256xf32>
    %16 = arith.addf %14, %15 : vector<8x256xf32>
    %17 = math.sqrt %16 : vector<8x256xf32>
    %18 = arith.subf %9, %17 : vector<8x256xf32>
    %19 = math.absf %18 : vector<8x256xf32>
    %20 = vector.shape_cast %19 : vector<8x256xf32> to vector<1x8x256xf32>
    %cst_10 = arith.constant dense<0.000000e+00> : vector<1xf32>
    %21 = vector.multi_reduction <add>, %20, %cst_10 [1, 2] : vector<1x8x256xf32> to vector<1xf32>
    %22 = vector.shape_cast %21 : vector<1xf32> to vector<1x1x1xf32>
    %23 = vector.extract %22[0, 0, 0] : f32 from vector<1x1x1xf32>
    %24 = vector.broadcast %23 : f32 to vector<1x8x128xf32>
    %c0_11 = arith.constant 0 : index
    %c0_12 = arith.constant 0 : index
    %c0_13 = arith.constant 0 : index
    %25 = vector.load %arg5[%c0_11, %c0_12, %c0_13] : memref<1x8x128xf32, #tpu.memory_space<vmem>>, vector<1x8x128xf32>
    tpu.vector_store %arg5[%c0_11, %c0_12, %c0_13], %24 {strides = array<i32>} : memref<1x8x128xf32, #tpu.memory_space<vmem>>, vector<1x8x128xf32>,
    return
  }
  func.func @transform_0(%arg0: i32) -> (i32, i32) {
    %c0_i32 = arith.constant 0 : i32
    %c0_i32_0 = arith.constant 0 : i32
    return %arg0, %c0_i32 : i32, i32
  }
  func.func @transform_1(%arg0: i32) -> (i32, i32) {
    %c0_i32 = arith.constant 0 : i32
    %c0_i32_0 = arith.constant 0 : i32
    return %arg0, %c0_i32 : i32, i32
  }
  func.func @transform_2(%arg0: i32) -> (i32, i32) {
    %c0_i32 = arith.constant 0 : i32
    %c0_i32_0 = arith.constant 0 : i32
    %c0_i32_1 = arith.constant 0 : i32
    return %c0_i32, %c0_i32_0 : i32, i32
  }
  func.func @transform_3(%arg0: i32) -> (i32, i32) {
    %c0_i32 = arith.constant 0 : i32
    %c0_i32_0 = arith.constant 0 : i32
    %c0_i32_1 = arith.constant 0 : i32
    return %c0_i32, %c0_i32_0 : i32, i32
  }
  func.func @transform_4(%arg0: i32) -> (i32, i32, i32) {
    %c0_i32 = arith.constant 0 : i32
    %c0_i32_0 = arith.constant 0 : i32
    %c0_i32_1 = arith.constant 0 : i32
    return %arg0, %c0_i32, %c0_i32_0 : i32, i32, i32
  }
}

</mosaic_0001>

<llo_original>
// kernel: frequency_loss.1
$region0: #{frequency_loss.1}
  #allocation0 [shape = 'u32[]', space=smem, size = 0x4, offset = 0x4, fixed_abs, tag = 'smem constant byte address 0x4 - core index']
  #allocation1 [shape = 'u32[72,128]{1,0:T(1,128)}', space=vmem, size = 0x9000, scoped, tag = 'internal scratch']
  %s0 = inlined_call_operand.vmem [shape: f32[8,256], index: 0, kind: input, shape index: {}]
  %s1 = inlined_call_operand.vmem [shape: f32[8,256], index: 1, kind: input, shape index: {}]
  %s2 = inlined_call_operand.hbm [shape: bf16[256,256], index: 2, kind: input, shape index: {}]
  %s3 = inlined_call_operand.hbm [shape: bf16[256,256], index: 3, kind: input, shape index: {}]
  %s4 = inlined_call_operand.vmem [shape: f32[1,8,128], index: 4, kind: output, shape index: {}]
  %s5 = sld [smem:[#allocation0]]
  $region34: #{frequency_loss.1} parent=0
    _
  %s7 = ssub.s32 1, %s5
  %s8 = scalar_select 0, %s7, %s5
  $region1: #{frequency_loss.1} parent=0
    #allocation2 [shape = 'u8[131072]{0}', space=vmem, size = 0x20000, scoped, tag = 'input window, operand 2, single buffered']
    #allocation3 [shape = 's32[1]{0}', space=sflag, size = 0x4, scoped, tag = 'scoped memory for frequency_loss.1']
    #allocation4 [shape = 'u8[131072]{0}', space=vmem, size = 0x20000, scoped, tag = 'input window, operand 3, single buffered']
    #allocation5 [shape = 's32[1]{0}', space=sflag, size = 0x4, scoped, tag = 'scoped memory for frequency_loss.1']
    %9 = vsyncpa [#allocation3], 0
    %10 = vsyncpa [#allocation5], 0
    // Predicated region
    $region2: #{frequency_loss.1} parent=1 // pred_check
      _
    $region3: #{frequency_loss.1} parent=1 // pred_check_branch
      %12 = sbr.rel (0) target = $region5
    $region4: #{frequency_loss.1} parent=1 // pred_region
      _
    $region5: #{frequency_loss.1} parent=1 // pred_fallthru
      _
    // Predicated region
    $region6: #{frequency_loss.1} parent=1 // pred_check
      _
    $region7: #{frequency_loss.1} parent=1 // pred_check_branch
      %14 = sbr.rel (0) target = $region9
    $region8: #{frequency_loss.1} parent=1 // pred_region
      _
    $region9: #{frequency_loss.1} parent=1 // pred_fallthru
      _
    // Predicated region
    $region10: #{frequency_loss.1} parent=1 // pred_check
      _
    $region11: #{frequency_loss.1} parent=1 // pred_check_branch
      %16 = sbr.rel (0) target = $region13
    $region12: #{frequency_loss.1} parent=1 // pred_region
      %18 = vsyncadd [#allocation3], 0
      %s19 = sshll.u32 %s2, 4
      %s20 = int_to_ptr.hbm [resolvable:$true] %s19
      %s21 = sshll.u32 [#allocation2], 4
      %s22 = int_to_ptr.vmem [resolvable:$true] %s21
      %27 = dma.hbm_to_vmem [thread:$0]  %s20, 4096, %s22, [#allocation3], 128, 128, 8
    $region13: #{frequency_loss.1} parent=1 // pred_fallthru
      _
    // Predicated region
    $region14: #{frequency_loss.1} parent=1 // pred_check
      _
    $region15: #{frequency_loss.1} parent=1 // pred_check_branch
      %29 = sbr.rel (0) target = $region17
    $region16: #{frequency_loss.1} parent=1 // pred_region
      %31 = vsyncadd [#allocation5], 0
      %s32 = sshll.u32 %s3, 4
      %s33 = int_to_ptr.hbm [resolvable:$true] %s32
      %s34 = sshll.u32 [#allocation4], 4
      %s35 = int_to_ptr.vmem [resolvable:$true] %s34
      %40 = dma.hbm_to_vmem [thread:$0]  %s33, 4096, %s35, [#allocation5], 128, 128, 8
    $region17: #{frequency_loss.1} parent=1 // pred_fallthru
      _
    // Predicated region
    $region18: #{frequency_loss.1} parent=1 // pred_check
      _
    $region19: #{frequency_loss.1} parent=1 // pred_check_branch
      %42 = sbr.rel (0) target = $region21
    $region20: #{frequency_loss.1} parent=1 // pred_region
      %44 = dma.done [#allocation3], 4096
    $region21: #{frequency_loss.1} parent=1 // pred_fallthru
      _
    // Predicated region
    $region22: #{frequency_loss.1} parent=1 // pred_check
      _
    $region23: #{frequency_loss.1} parent=1 // pred_check_branch
      %46 = sbr.rel (0) target = $region25
    $region24: #{frequency_loss.1} parent=1 // pred_region
      %48 = dma.done [#allocation5], 4096
    $region25: #{frequency_loss.1} parent=1 // pred_fallthru
      _
    %v49 = vld [vmem:[#allocation2] sm:$0xff]
    %v50 = vld [vmem:[#allocation2 + $0x8] sm:$0xff]
    %v51 = vld [vmem:[#allocation2 + $0x10] sm:$0xff]
    %v52 = vld [vmem:[#allocation2 + $0x18] sm:$0xff]
    %v53 = vld [vmem:[#allocation2 + $0x20] sm:$0xff]
    %v54 = vld [vmem:[#allocation2 + $0x28] sm:$0xff]
    %v55 = vld [vmem:[#allocation2 + $0x30] sm:$0xff]
    %v56 = vld [vmem:[#allocation2 + $0x38] sm:$0xff]
    %v57 = vld [vmem:[#allocation2 + $0x40] sm:$0xff]
    %v58 = vld [vmem:[#allocation2 + $0x48] sm:$0xff]
    %v59 = vld [vmem:[#allocation2 + $0x50] sm:$0xff]
    %v60 = vld [vmem:[#allocation2 + $0x58] sm:$0xff]
    %v61 = vld [vmem:[#allocation2 + $0x60] sm:$0xff]
    %v62 = vld [vmem:[#allocation2 + $0x68] sm:$0xff]
    %v63 = vld [vmem:[#allocation2 + $0x70] sm:$0xff]
    %v64 = vld [vmem:[#allocation2 + $0x78] sm:$0xff]
    %v65 = vld [vmem:[#allocation2 + $0x80] sm:$0xff]
    %v66 = vld [vmem:[#allocation2 + $0x88] sm:$0xff]
    %v67 = vld [vmem:[#allocation2 + $0x90] sm:$0xff]
    %v68 = vld [vmem:[#allocation2 + $0x98] sm:$0xff]
    %v69 = vld [vmem:[#allocation2 + $0xa0] sm:$0xff]
    %v70 = vld [vmem:[#allocation2 + $0xa8] sm:$0xff]
    %v71 = vld [vmem:[#allocation2 + $0xb0] sm:$0xff]
    %v72 = vld [vmem:[#allocation2 + $0xb8] sm:$0xff]
    %v73 = vld [vmem:[#allocation2 + $0xc0] sm:$0xff]
    %v74 = vld [vmem:[#allocation2 + $0xc8] sm:$0xff]
    %v75 = vld [vmem:[#allocation2 + $0xd0] sm:$0xff]
    %v76 = vld [vmem:[#allocation2 + $0xd8] sm:$0xff]
    %v77 = vld [vmem:[#allocation2 + $0xe0] sm:$0xff]
    %v78 = vld [vmem:[#allocation2 + $0xe8] sm:$0xff]
    %v79 = vld [vmem:[#allocation2 + $0xf0] sm:$0xff]
    %v80 = vld [vmem:[#allocation2 + $0xf8] sm:$0xff]
    %v81 = vld [vmem:[#allocation4] sm:$0xff]
    %v82 = vld [vmem:[#allocation4 + $0x8] sm:$0xff]
    %v83 = vld [vmem:[#allocation4 + $0x10] sm:$0xff]
    %v84 = vld [vmem:[#allocation4 + $0x18] sm:$0xff]
    %v85 = vld [vmem:[#allocation4 + $0x20] sm:$0xff]
    %v86 = vld [vmem:[#allocation4 + $0x28] sm:$0xff]
    %v87 = vld [vmem:[#allocation4 + $0x30] sm:$0xff]
    %v88 = vld [vmem:[#allocation4 + $0x38] sm:$0xff]
    %v89 = vld [vmem:[#allocation4 + $0x40] sm:$0xff]
    %v90 = vld [vmem:[#allocation4 + $0x48] sm:$0xff]
    %v91 = vld [vmem:[#allocation4 + $0x50] sm:$0xff]
    %v92 = vld [vmem:[#allocation4 + $0x58] sm:$0xff]
    %v93 = vld [vmem:[#allocation4 + $0x60] sm:$0xff]
    %v94 = vld [vmem:[#allocation4 + $0x68] sm:$0xff]
    %v95 = vld [vmem:[#allocation4 + $0x70] sm:$0xff]
    %v96 = vld [vmem:[#allocation4 + $0x78] sm:$0xff]
    %v97 = vld [vmem:[#allocation4 + $0x80] sm:$0xff]
    %v98 = vld [vmem:[#allocation4 + $0x88] sm:$0xff]
    %v99 = vld [vmem:[#allocation4 + $0x90] sm:$0xff]
    %v100 = vld [vmem:[#allocation4 + $0x98] sm:$0xff]
    %v101 = vld [vmem:[#allocation4 + $0xa0] sm:$0xff]
    %v102 = vld [vmem:[#allocation4 + $0xa8] sm:$0xff]
    %v103 = vld [vmem:[#allocation4 + $0xb0] sm:$0xff]
    %v104 = vld [vmem:[#allocation4 + $0xb8] sm:$0xff]
    %v105 = vld [vmem:[#allocation4 + $0xc0] sm:$0xff]
    %v106 = vld [vmem:[#allocation4 + $0xc8] sm:$0xff]
    %v107 = vld [vmem:[#allocation4 + $0xd0] sm:$0xff]
    %v108 = vld [vmem:[#allocation4 + $0xd8] sm:$0xff]
    %v109 = vld [vmem:[#allocation4 + $0xe0] sm:$0xff]
    %v110 = vld [vmem:[#allocation4 + $0xe8] sm:$0xff]
    %v111 = vld [vmem:[#allocation4 + $0xf0] sm:$0xff]
    %v112 = vld [vmem:[#allocation4 + $0xf8] sm:$0xff]
    %v113 = vld [vmem:[%s0] sm:$0xff]
    %v114 = vld [vmem:[%s0 + $0x8] sm:$0xff]
    %v115 = vpack.c.bf16 %v113, %v113
    %v116 = vpack.c.bf16 %v114, %v114
    %v149 = vunpack.c.l.b16 %v49
    %v150 = vunpack.c.h.b16 %v49
    %v151 = vunpack.c.l.b16 %v50
    %v152 = vunpack.c.h.b16 %v50
    %v153 = vunpack.c.l.b16 %v51
    %v154 = vunpack.c.h.b16 %v51
    %v155 = vunpack.c.l.b16 %v52
    %v156 = vunpack.c.h.b16 %v52
    %v157 = vunpack.c.l.b16 %v53
    %v158 = vunpack.c.h.b16 %v53
    %v159 = vunpack.c.l.b16 %v54
    %v160 = vunpack.c.h.b16 %v54
    %v161 = vunpack.c.l.b16 %v55
    %v162 = vunpack.c.h.b16 %v55
    %v163 = vunpack.c.l.b16 %v56
    %v164 = vunpack.c.h.b16 %v56
    %v165 = vunpack.c.l.b16 %v57
    %v166 = vunpack.c.h.b16 %v57
    %v167 = vunpack.c.l.b16 %v58
    %v168 = vunpack.c.h.b16 %v58
    %v169 = vunpack.c.l.b16 %v59
    %v170 = vunpack.c.h.b16 %v59
    %v171 = vunpack.c.l.b16 %v60
    %v172 = vunpack.c.h.b16 %v60
    %v173 = vunpack.c.l.b16 %v61
    %v174 = vunpack.c.h.b16 %v61
    %v175 = vunpack.c.l.b16 %v62
    %v176 = vunpack.c.h.b16 %v62
    %v177 = vunpack.c.l.b16 %v63
    %v178 = vunpack.c.h.b16 %v63
    %v179 = vunpack.c.l.b16 %v64
    %v180 = vunpack.c.h.b16 %v64
    %v181 = vunpack.c.l.b16 %v65
    %v182 = vunpack.c.h.b16 %v65
    %v183 = vunpack.c.l.b16 %v66
    %v184 = vunpack.c.h.b16 %v66
    %v185 = vunpack.c.l.b16 %v67
    %v186 = vunpack.c.h.b16 %v67
    %v187 = vunpack.c.l.b16 %v68
    %v188 = vunpack.c.h.b16 %v68
    %v189 = vunpack.c.l.b16 %v69
    %v190 = vunpack.c.h.b16 %v69
    %v191 = vunpack.c.l.b16 %v70
    %v192 = vunpack.c.h.b16 %v70
    %v193 = vunpack.c.l.b16 %v71
    %v194 = vunpack.c.h.b16 %v71
    %v195 = vunpack.c.l.b16 %v72
    %v196 = vunpack.c.h.b16 %v72
    %v197 = vunpack.c.l.b16 %v73
    %v198 = vunpack.c.h.b16 %v73
    %v199 = vunpack.c.l.b16 %v74
    %v200 = vunpack.c.h.b16 %v74
    %v201 = vunpack.c.l.b16 %v75
    %v202 = vunpack.c.h.b16 %v75
    %v203 = vunpack.c.l.b16 %v76
    %v204 = vunpack.c.h.b16 %v76
    %v205 = vunpack.c.l.b16 %v77
    %v206 = vunpack.c.h.b16 %v77
    %v207 = vunpack.c.l.b16 %v78
    %v208 = vunpack.c.h.b16 %v78
    %v209 = vunpack.c.l.b16 %v79
    %v210 = vunpack.c.h.b16 %v79
    %v211 = vunpack.c.l.b16 %v80
    %v212 = vunpack.c.h.b16 %v80
    %v213 = vpack.c.b16 %v151, %v149
    %v214 = vpack.c.b16 %v152, %v150
    %v215 = vpack.c.b16 %v155, %v153
    %v216 = vpack.c.b16 %v156, %v154
    %v217 = vpack.c.b16 %v159, %v157
    %v218 = vpack.c.b16 %v160, %v158
    %v219 = vpack.c.b16 %v163, %v161
    %v220 = vpack.c.b16 %v164, %v162
    %v221 = vpack.c.b16 %v167, %v165
    %v222 = vpack.c.b16 %v168, %v166
    %v223 = vpack.c.b16 %v171, %v169
    %v224 = vpack.c.b16 %v172, %v170
    %v225 = vpack.c.b16 %v175, %v173
    %v226 = vpack.c.b16 %v176, %v174
    %v227 = vpack.c.b16 %v179, %v177
    %v228 = vpack.c.b16 %v180, %v178
    %v229 = vpack.c.b16 %v183, %v181
    %v230 = vpack.c.b16 %v184, %v182
    %v231 = vpack.c.b16 %v187, %v185
    %v232 = vpack.c.b16 %v188, %v186
    %v233 = vpack.c.b16 %v191, %v189
    %v234 = vpack.c.b16 %v192, %v190
    %v235 = vpack.c.b16 %v195, %v193
    %v236 = vpack.c.b16 %v196, %v194
    %v237 = vpack.c.b16 %v199, %v197
    %v238 = vpack.c.b16 %v200, %v198
    %v239 = vpack.c.b16 %v203, %v201
    %v240 = vpack.c.b16 %v204, %v202
    %v241 = vpack.c.b16 %v207, %v205
    %v242 = vpack.c.b16 %v208, %v206
    %v243 = vpack.c.b16 %v211, %v209
    %v244 = vpack.c.b16 %v212, %v210
    %277 = vmatpush.bf16.msra.mxu0 %v227
    %278 = vmatpush.bf16.msra.mxu0 %v225
    %279 = vmatpush.bf16.msra.mxu0 %v223
    %280 = vmatpush.bf16.msra.mxu0 %v221
    %281 = vmatpush.bf16.msra.mxu0 %v219
    %282 = vmatpush.bf16.msra.mxu0 %v217
    %283 = vmatpush.bf16.msra.mxu0 %v215
    %284 = vmatpush.bf16.msra.mxu0 %v213
    %285 = vmatmul.bf16.gmra.mxu0 %v115
    %v286 = vpop.f32.mrf.mxu0
    %v287 = vadd.f32 0.0, %v286
    %v288 = vpop.f32.mrf.mxu0
    %289 = vdwg.mxu0
    %290 = vmatpush.bf16.msra.mxu0 %v243
    %291 = vmatpush.bf16.msra.mxu0 %v241
    %292 = vmatpush.bf16.msra.mxu0 %v239
    %293 = vmatpush.bf16.msra.mxu0 %v237
    %294 = vmatpush.bf16.msra.mxu0 %v235
    %295 = vmatpush.bf16.msra.mxu0 %v233
    %296 = vmatpush.bf16.msra.mxu0 %v231
    %297 = vmatpush.bf16.msra.mxu0 %v229
    %298 = vmatmul.bf16.gmra.mxu0 %v116
    %v299 = vpop.f32.mrf.mxu0
    %v300 = vadd.f32 %v287, %v299
    %v301 = vpop.f32.mrf.mxu0
    %302 = vdwg.mxu0
    %303 = vmatpush.bf16.msra.mxu0 %v228
    %304 = vmatpush.bf16.msra.mxu0 %v226
    %305 = vmatpush.bf16.msra.mxu0 %v224
    %306 = vmatpush.bf16.msra.mxu0 %v222
    %307 = vmatpush.bf16.msra.mxu0 %v220
    %308 = vmatpush.bf16.msra.mxu0 %v218
    %309 = vmatpush.bf16.msra.mxu0 %v216
    %310 = vmatpush.bf16.msra.mxu0 %v214
    %311 = vmatmul.bf16.gmra.mxu0 %v115
    %v312 = vpop.f32.mrf.mxu0
    %v313 = vadd.f32 0.0, %v312
    %v314 = vpop.f32.mrf.mxu0
    %315 = vdwg.mxu0
    %316 = vmatpush.bf16.msra.mxu0 %v244
    %317 = vmatpush.bf16.msra.mxu0 %v242
    %318 = vmatpush.bf16.msra.mxu0 %v240
    %319 = vmatpush.bf16.msra.mxu0 %v238
    %320 = vmatpush.bf16.msra.mxu0 %v236
    %321 = vmatpush.bf16.msra.mxu0 %v234
    %322 = vmatpush.bf16.msra.mxu0 %v232
    %323 = vmatpush.bf16.msra.mxu0 %v230
    %324 = vmatmul.bf16.gmra.mxu0 %v116
    %v325 = vpop.f32.mrf.mxu0
    %v326 = vadd.f32 %v313, %v325
    %v327 = vpop.f32.mrf.mxu0
    %328 = vdwg.mxu0
    %v361 = vunpack.c.l.b16 %v81
    %v362 = vunpack.c.h.b16 %v81
    %v363 = vunpack.c.l.b16 %v82
    %v364 = vunpack.c.h.b16 %v82
    %v365 = vunpack.c.l.b16 %v83
    %v366 = vunpack.c.h.b16 %v83
    %v367 = vunpack.c.l.b16 %v84
    %v368 = vunpack.c.h.b16 %v84
    %v369 = vunpack.c.l.b16 %v85
    %v370 = vunpack.c.h.b16 %v85
    %v371 = vunpack.c.l.b16 %v86
    %v372 = vunpack.c.h.b16 %v86
    %v373 = vunpack.c.l.b16 %v87
    %v374 = vunpack.c.h.b16 %v87
    %v375 = vunpack.c.l.b16 %v88
    %v376 = vunpack.c.h.b16 %v88
    %v377 = vunpack.c.l.b16 %v89
    %v378 = vunpack.c.h.b16 %v89
    %v379 = vunpack.c.l.b16 %v90
    %v380 = vunpack.c.h.b16 %v90
    %v381 = vunpack.c.l.b16 %v91
    %v382 = vunpack.c.h.b16 %v91
    %v383 = vunpack.c.l.b16 %v92
    %v384 = vunpack.c.h.b16 %v92
    %v385 = vunpack.c.l.b16 %v93
    %v386 = vunpack.c.h.b16 %v93
    %v387 = vunpack.c.l.b16 %v94
    %v388 = vunpack.c.h.b16 %v94
    %v389 = vunpack.c.l.b16 %v95
    %v390 = vunpack.c.h.b16 %v95
    %v391 = vunpack.c.l.b16 %v96
    %v392 = vunpack.c.h.b16 %v96
    %v393 = vunpack.c.l.b16 %v97
    %v394 = vunpack.c.h.b16 %v97
    %v395 = vunpack.c.l.b16 %v98
    %v396 = vunpack.c.h.b16 %v98
    %v397 = vunpack.c.l.b16 %v99
    %v398 = vunpack.c.h.b16 %v99
    %v399 = vunpack.c.l.b16 %v100
    %v400 = vunpack.c.h.b16 %v100
    %v401 = vunpack.c.l.b16 %v101
    %v402 = vunpack.c.h.b16 %v101
    %v403 = vunpack.c.l.b16 %v102
    %v404 = vunpack.c.h.b16 %v102
    %v405 = vunpack.c.l.b16 %v103
    %v406 = vunpack.c.h.b16 %v103
    %v407 = vunpack.c.l.b16 %v104
    %v408 = vunpack.c.h.b16 %v104
    %v409 = vunpack.c.l.b16 %v105
    %v410 = vunpack.c.h.b16 %v105
    %v411 = vunpack.c.l.b16 %v106
    %v412 = vunpack.c.h.b16 %v106
    %v413 = vunpack.c.l.b16 %v107
    %v414 = vunpack.c.h.b16 %v107
    %v415 = vunpack.c.l.b16 %v108
    %v416 = vunpack.c.h.b16 %v108
    %v417 = vunpack.c.l.b16 %v109
    %v418 = vunpack.c.h.b16 %v109
    %v419 = vunpack.c.l.b16 %v110
    %v420 = vunpack.c.h.b16 %v110
    %v421 = vunpack.c.l.b16 %v111
    %v422 = vunpack.c.h.b16 %v111
    %v423 = vunpack.c.l.b16 %v112
    %v424 = vunpack.c.h.b16 %v112
    %v425 = vpack.c.b16 %v363, %v361
    %v426 = vpack.c.b16 %v364, %v362
    %v427 = vpack.c.b16 %v367, %v365
    %v428 = vpack.c.b16 %v368, %v366
    %v429 = vpack.c.b16 %v371, %v369
    %v430 = vpack.c.b16 %v372, %v370
    %v431 = vpack.c.b16 %v375, %v373
    %v432 = vpack.c.b16 %v376, %v374
    %v433 = vpack.c.b16 %v379, %v377
    %v434 = vpack.c.b16 %v380, %v378
    %v435 = vpack.c.b16 %v383, %v381
    %v436 = vpack.c.b16 %v384, %v382
    %v437 = vpack.c.b16 %v387, %v385
    %v438 = vpack.c.b16 %v388, %v386
    %v439 = vpack.c.b16 %v391, %v389
    %v440 = vpack.c.b16 %v392, %v390
    %v441 = vpack.c.b16 %v395, %v393
    %v442 = vpack.c.b16 %v396, %v394
    %v443 = vpack.c.b16 %v399, %v397
    %v444 = vpack.c.b16 %v400, %v398
    %v445 = vpack.c.b16 %v403, %v401
    %v446 = vpack.c.b16 %v404, %v402
    %v447 = vpack.c.b16 %v407, %v405
    %v448 = vpack.c.b16 %v408, %v406
    %v449 = vpack.c.b16 %v411, %v409
    %v450 = vpack.c.b16 %v412, %v410
    %v451 = vpack.c.b16 %v415, %v413
    %v452 = vpack.c.b16 %v416, %v414
    %v453 = vpack.c.b16 %v419, %v417
    %v454 = vpack.c.b16 %v420, %v418
    %v455 = vpack.c.b16 %v423, %v421
    %v456 = vpack.c.b16 %v424, %v422
    %489 = vmatpush.bf16.msra.mxu0 %v439
    %490 = vmatpush.bf16.msra.mxu0 %v437
    %491 = vmatpush.bf16.msra.mxu0 %v435
    %492 = vmatpush.bf16.msra.mxu0 %v433
    %493 = vmatpush.bf16.msra.mxu0 %v431
    %494 = vmatpush.bf16.msra.mxu0 %v429
    %495 = vmatpush.bf16.msra.mxu0 %v427
    %496 = vmatpush.bf16.msra.mxu0 %v425
    %497 = vmatmul.bf16.gmra.mxu0 %v115
    %v498 = vpop.f32.mrf.mxu0
    %v499 = vadd.f32 0.0, %v498
    %v500 = vpop.f32.mrf.mxu0
    %501 = vdwg.mxu0
    %502 = vmatpush.bf16.msra.mxu0 %v455
    %503 = vmatpush.bf16.msra.mxu0 %v453
    %504 = vmatpush.bf16.msra.mxu0 %v451
    %505 = vmatpush.bf16.msra.mxu0 %v449
    %506 = vmatpush.bf16.msra.mxu0 %v447
    %507 = vmatpush.bf16.msra.mxu0 %v445
    %508 = vmatpush.bf16.msra.mxu0 %v443
    %509 = vmatpush.bf16.msra.mxu0 %v441
    %510 = vmatmul.bf16.gmra.mxu0 %v116
    %v511 = vpop.f32.mrf.mxu0
    %v512 = vadd.f32 %v499, %v511
    %v513 = vpop.f32.mrf.mxu0
    %514 = vdwg.mxu0
    %515 = vmatpush.bf16.msra.mxu0 %v440
    %516 = vmatpush.bf16.msra.mxu0 %v438
    %517 = vmatpush.bf16.msra.mxu0 %v436
    %518 = vmatpush.bf16.msra.mxu0 %v434
    %519 = vmatpush.bf16.msra.mxu0 %v432
    %520 = vmatpush.bf16.msra.mxu0 %v430
    %521 = vmatpush.bf16.msra.mxu0 %v428
    %522 = vmatpush.bf16.msra.mxu0 %v426
    %523 = vmatmul.bf16.gmra.mxu0 %v115
    %v524 = vpop.f32.mrf.mxu0
    %v525 = vadd.f32 0.0, %v524
    %v526 = vpop.f32.mrf.mxu0
    %527 = vdwg.mxu0
    %528 = vmatpush.bf16.msra.mxu0 %v456
    %529 = vmatpush.bf16.msra.mxu0 %v454
    %530 = vmatpush.bf16.msra.mxu0 %v452
    %531 = vmatpush.bf16.msra.mxu0 %v450
    %532 = vmatpush.bf16.msra.mxu0 %v448
    %533 = vmatpush.bf16.msra.mxu0 %v446
    %534 = vmatpush.bf16.msra.mxu0 %v444
    %535 = vmatpush.bf16.msra.mxu0 %v442
    %536 = vmatmul.bf16.gmra.mxu0 %v116
    %v537 = vpop.f32.mrf.mxu0
    %v538 = vadd.f32 %v525, %v537
    %v539 = vpop.f32.mrf.mxu0
    %540 = vdwg.mxu0
    %v541 = vmul.f32 %v300, %v300
    %v542 = vmul.f32 %v326, %v326
    %v543 = vmul.f32 %v512, %v512
    %v544 = vmul.f32 %v538, %v538
    %v545 = vadd.f32 %v541, %v543
    %v546 = vadd.f32 %v542, %v544
    %v547 = vrsqrt.pop %v545
    %v548 = vmul.f32 %v547, %v545
    %v549 = vmul.f32 %v548, %v547
    %v550 = vmul.f32 0.5, %v549
    %v551 = vsub.f32 1.5, %v550
    %v552 = vmul.f32 %v547, %v551
    %v553 = vmul.f32 %v545, %v552
    %vm554 = vcmp.eq.f32.partialorder %v545, inf
    %v555 = vsel %vm554, %v545, %v553
    %vm556 = vcmp.eq.f32.partialorder %v545, 0.0
    %v557 = vand.u32 %v545, 2147483648
    %v558 = vsel %vm556, %v557, %v555
    %v559 = vrsqrt.pop %v546
    %v560 = vmul.f32 %v559, %v546
    %v561 = vmul.f32 %v560, %v559
    %v562 = vmul.f32 0.5, %v561
    %v563 = vsub.f32 1.5, %v562
    %v564 = vmul.f32 %v559, %v563
    %v565 = vmul.f32 %v546, %v564
    %vm566 = vcmp.eq.f32.partialorder %v546, inf
    %v567 = vsel %vm566, %v546, %v565
    %vm568 = vcmp.eq.f32.partialorder %v546, 0.0
    %v569 = vand.u32 %v546, 2147483648
    %v570 = vsel %vm568, %v569, %v567
    %v571 = vld [vmem:[%s1] sm:$0xff]
    %v572 = vld [vmem:[%s1 + $0x8] sm:$0xff]
    %v573 = vpack.c.bf16 %v571, %v571
    %v574 = vpack.c.bf16 %v572, %v572
    %575 = vmatpush.bf16.msra.mxu0 %v227
    %576 = vmatpush.bf16.msra.mxu0 %v225
    %577 = vmatpush.bf16.msra.mxu0 %v223
    %578 = vmatpush.bf16.msra.mxu0 %v221
    %579 = vmatpush.bf16.msra.mxu0 %v219
    %580 = vmatpush.bf16.msra.mxu0 %v217
    %581 = vmatpush.bf16.msra.mxu0 %v215
    %582 = vmatpush.bf16.msra.mxu0 %v213
    %583 = vmatmul.bf16.gmra.mxu0 %v573
    %v584 = vpop.f32.mrf.mxu0
    %v585 = vadd.f32 0.0, %v584
    %v586 = vpop.f32.mrf.mxu0
    %587 = vdwg.mxu0
    %588 = vmatpush.bf16.msra.mxu0 %v243
    %589 = vmatpush.bf16.msra.mxu0 %v241
    %590 = vmatpush.bf16.msra.mxu0 %v239
    %591 = vmatpush.bf16.msra.mxu0 %v237
    %592 = vmatpush.bf16.msra.mxu0 %v235
    %593 = vmatpush.bf16.msra.mxu0 %v233
    %594 = vmatpush.bf16.msra.mxu0 %v231
    %595 = vmatpush.bf16.msra.mxu0 %v229
    %596 = vmatmul.bf16.gmra.mxu0 %v574
    %v597 = vpop.f32.mrf.mxu0
    %v598 = vadd.f32 %v585, %v597
    %v599 = vpop.f32.mrf.mxu0
    %600 = vdwg.mxu0
    %601 = vmatpush.bf16.msra.mxu0 %v228
    %602 = vmatpush.bf16.msra.mxu0 %v226
    %603 = vmatpush.bf16.msra.mxu0 %v224
    %604 = vmatpush.bf16.msra.mxu0 %v222
    %605 = vmatpush.bf16.msra.mxu0 %v220
    %606 = vmatpush.bf16.msra.mxu0 %v218
    %607 = vmatpush.bf16.msra.mxu0 %v216
    %608 = vmatpush.bf16.msra.mxu0 %v214
    %609 = vmatmul.bf16.gmra.mxu0 %v573
    %v610 = vpop.f32.mrf.mxu0
    %v611 = vadd.f32 0.0, %v610
    %v612 = vpop.f32.mrf.mxu0
    %613 = vdwg.mxu0
    %614 = vmatpush.bf16.msra.mxu0 %v244
    %615 = vmatpush.bf16.msra.mxu0 %v242
    %616 = vmatpush.bf16.msra.mxu0 %v240
    %617 = vmatpush.bf16.msra.mxu0 %v238
    %618 = vmatpush.bf16.msra.mxu0 %v236
    %619 = vmatpush.bf16.msra.mxu0 %v234
    %620 = vmatpush.bf16.msra.mxu0 %v232
    %621 = vmatpush.bf16.msra.mxu0 %v230
    %622 = vmatmul.bf16.gmra.mxu0 %v574
    %v623 = vpop.f32.mrf.mxu0
    %v624 = vadd.f32 %v611, %v623
    %v625 = vpop.f32.mrf.mxu0
    %626 = vdwg.mxu0
    %627 = vmatpush.bf16.msra.mxu0 %v439
    %628 = vmatpush.bf16.msra.mxu0 %v437
    %629 = vmatpush.bf16.msra.mxu0 %v435
    %630 = vmatpush.bf16.msra.mxu0 %v433
    %631 = vmatpush.bf16.msra.mxu0 %v431
    %632 = vmatpush.bf16.msra.mxu0 %v429
    %633 = vmatpush.bf16.msra.mxu0 %v427
    %634 = vmatpush.bf16.msra.mxu0 %v425
    %635 = vmatmul.bf16.gmra.mxu0 %v573
    %v636 = vpop.f32.mrf.mxu0
    %v637 = vadd.f32 0.0, %v636
    %v638 = vpop.f32.mrf.mxu0
    %639 = vdwg.mxu0
    %640 = vmatpush.bf16.msra.mxu0 %v455
    %641 = vmatpush.bf16.msra.mxu0 %v453
    %642 = vmatpush.bf16.msra.mxu0 %v451
    %643 = vmatpush.bf16.msra.mxu0 %v449
    %644 = vmatpush.bf16.msra.mxu0 %v447
    %645 = vmatpush.bf16.msra.mxu0 %v445
    %646 = vmatpush.bf16.msra.mxu0 %v443
    %647 = vmatpush.bf16.msra.mxu0 %v441
    %648 = vmatmul.bf16.gmra.mxu0 %v574
    %v649 = vpop.f32.mrf.mxu0
    %v650 = vadd.f32 %v637, %v649
    %v651 = vpop.f32.mrf.mxu0
    %652 = vdwg.mxu0
    %653 = vmatpush.bf16.msra.mxu0 %v440
    %654 = vmatpush.bf16.msra.mxu0 %v438
    %655 = vmatpush.bf16.msra.mxu0 %v436
    %656 = vmatpush.bf16.msra.mxu0 %v434
    %657 = vmatpush.bf16.msra.mxu0 %v432
    %658 = vmatpush.bf16.msra.mxu0 %v430
    %659 = vmatpush.bf16.msra.mxu0 %v428
    %660 = vmatpush.bf16.msra.mxu0 %v426
    %661 = vmatmul.bf16.gmra.mxu0 %v573
    %v662 = vpop.f32.mrf.mxu0
    %v663 = vadd.f32 0.0, %v662
    %v664 = vpop.f32.mrf.mxu0
    %665 = vdwg.mxu0
    %666 = vmatpush.bf16.msra.mxu0 %v456
    %667 = vmatpush.bf16.msra.mxu0 %v454
    %668 = vmatpush.bf16.msra.mxu0 %v452
    %669 = vmatpush.bf16.msra.mxu0 %v450
    %670 = vmatpush.bf16.msra.mxu0 %v448
    %671 = vmatpush.bf16.msra.mxu0 %v446
    %672 = vmatpush.bf16.msra.mxu0 %v444
    %673 = vmatpush.bf16.msra.mxu0 %v442
    %674 = vmatmul.bf16.gmra.mxu0 %v574
    %v675 = vpop.f32.mrf.mxu0
    %v676 = vadd.f32 %v663, %v675
    %v677 = vpop.f32.mrf.mxu0
    %678 = vdwg.mxu0
    %v679 = vmul.f32 %v598, %v598
    %v680 = vmul.f32 %v624, %v624
    %v681 = vmul.f32 %v650, %v650
    %v682 = vmul.f32 %v676, %v676
    %v683 = vadd.f32 %v679, %v681
    %v684 = vadd.f32 %v680, %v682
    %v685 = vrsqrt.pop %v683
    %v686 = vmul.f32 %v685, %v683
    %v687 = vmul.f32 %v686, %v685
    %v688 = vmul.f32 0.5, %v687
    %v689 = vsub.f32 1.5, %v688
    %v690 = vmul.f32 %v685, %v689
    %v691 = vmul.f32 %v683, %v690
    %vm692 = vcmp.eq.f32.partialorder %v683, inf
    %v693 = vsel %vm692, %v683, %v691
    %vm694 = vcmp.eq.f32.partialorder %v683, 0.0
    %v695 = vand.u32 %v683, 2147483648
    %v696 = vsel %vm694, %v695, %v693
    %v697 = vrsqrt.pop %v684
    %v698 = vmul.f32 %v697, %v684
    %v699 = vmul.f32 %v698, %v697
    %v700 = vmul.f32 0.5, %v699
    %v701 = vsub.f32 1.5, %v700
    %v702 = vmul.f32 %v697, %v701
    %v703 = vmul.f32 %v684, %v702
    %vm704 = vcmp.eq.f32.partialorder %v684, inf
    %v705 = vsel %vm704, %v684, %v703
    %vm706 = vcmp.eq.f32.partialorder %v684, 0.0
    %v707 = vand.u32 %v684, 2147483648
    %v708 = vsel %vm706, %v707, %v705
    %v709 = vsub.f32 %v558, %v696
    %v710 = vsub.f32 %v570, %v708
    %v711 = vand.u32 2147483647, %v709
    %v712 = vand.u32 2147483647, %v710
    %v713 = vadd.f32 %v711, %v712
    %714 = vadd.xlane.f32.xlu0 %v713
    %v715 = vpop.xlane.xlu0 %714
    %v716 = vrot.slane %v715, 4
    %v717 = vadd.f32 %v715, %v716
    %v718 = vrot.slane %v717, 2
    %v719 = vadd.f32 %v717, %v718
    %v720 = vrot.slane %v719, 1
    %v721 = vadd.f32 %v719, %v720
    %s722 = vtos %v721
    %v723 = vstv %s722
    %724 = vst [vmem:[%s4] sm:$0xff] %v723
    // Predicated region
    $region26: #{frequency_loss.1} parent=1 // pred_check
      _
    $region27: #{frequency_loss.1} parent=1 // pred_check_branch
      %726 = sbr.rel (0) target = $region29
    $region28: #{frequency_loss.1} parent=1 // pred_region
      _
    $region29: #{frequency_loss.1} parent=1 // pred_fallthru
      _
    // Predicated region
    $region30: #{frequency_loss.1} parent=1 // pred_check
      _
    $region31: #{frequency_loss.1} parent=1 // pred_check_branch
      %728 = sbr.rel (0) target = $region33
    $region32: #{frequency_loss.1} parent=1 // pred_region
      _
    $region33: #{frequency_loss.1} parent=1 // pred_fallthru
      _
    %729 = vsyncpa [#allocation3], 1
    %730 = vsyncpa [#allocation5], 1

</llo_original>
